<compile_context>
chip_gen: v6e
topology: v6e:2x2x1
jax: 0.10.0
libtpu: 0.0.40
codegen_flags: <defaults>
</compile_context>

<pallas_src>
import numpy as np

import jax
import jax.numpy as jnp
from jax.experimental import pallas as pl
from jax.experimental.pallas import tpu as pltpu


def _round_up(x: int, m: int) -> int:
    return ((x + m - 1) // m) * m


def _highway_kernel(x_ref, wp_ref, bp_ref, wc_ref, bc_ref, logits_ref, pooled_ref):
    # x_ref: (TB, H) CLS-token hidden states (seq dim squeezed out when reading
    # straight from the (B, S, H) buffer).  Cast to the MXU compute dtype
    # (bf16 by default) -- a free VPU op; accumulation stays f32.
    x = x_ref[...].astype(wp_ref.dtype)

    # BertPooler: tanh(x @ Wp^T + bp).  Wp arrives pre-transposed as (in, out),
    # so this is a plain row-major matmul with f32 accumulation on the MXU.
    pooled = jnp.dot(x, wp_ref[...], preferred_element_type=jnp.float32)
    pooled = jnp.tanh(pooled + bp_ref[...])          # bias add + tanh in f32
    pooled_ref[...] = pooled.astype(pooled_ref.dtype)

    # Dropout (seq_classif_dropout) is identity in eval mode.
    # Classifier: pooled @ Wc^T + bc.  Wc pre-transposed and lane-padded to a
    # 128-wide, lane-dense logits tile (unmasked vector stores).
    logits = jnp.dot(pooled.astype(wc_ref.dtype), wc_ref[...],
                     preferred_element_type=jnp.float32)
    logits_ref[...] = (logits + bc_ref[...]).astype(logits_ref.dtype)


def bert_highway_forward(hidden_states, pooler_w, pooler_b, clf_w, clf_b,
                         *, compute_dtype=jnp.bfloat16):
    """hidden_states: (B, S, H)
       pooler_w: (H, H)            PyTorch layout (out, in)
       pooler_b: (H,)
       clf_w:    (num_labels, H)   PyTorch layout (out, in)
       clf_b:    (num_labels,)
    Returns (logits (B, num_labels) in f32, pooled_output (B, H) in input dtype)."""
    B, S, H = hidden_states.shape
    num_labels = clf_w.shape[0]
    in_dtype = hidden_states.dtype

    # ---- tiling ----------------------------------------------------------
    # Sublane-friendly batch tile (bf16 packs 16 rows per vreg sublane group).
    sub = 16 if in_dtype == jnp.bfloat16 else 8
    max_tb = 256
    b_min = _round_up(B, sub)
    if b_min <= max_tb:
        # Split the batch over >= 2 grid steps when possible so the "parallel"
        # axis can shard across both v7x TensorCores.
        TB = _round_up(pl.cdiv(b_min, 2), sub) if b_min >= 2 * sub else b_min
    else:
        TB = max_tb
    num_tiles = pl.cdiv(B, TB)
    B_pad = num_tiles * TB                     # output padding only; inputs stay unpadded
    NL_pad = _round_up(num_labels, 128)        # lane-dense logits width

    # ---- one-time weight prep (hoisted out of the per-tile loop) ----------
    wp_t = pooler_w.T.astype(compute_dtype)                    # (H, H)     (in, out)
    wc = clf_w
    bc = clf_b
    if NL_pad != num_labels:
        wc = jnp.pad(wc, ((0, NL_pad - num_labels), (0, 0)))
        bc = jnp.pad(bc, ((0, NL_pad - num_labels),))
    wc_t = wc.T.astype(compute_dtype)                          # (H, NL_pad) (in, out)
    bp = pooler_b.reshape(1, H).astype(jnp.float32)
    bc = bc.reshape(1, NL_pad).astype(jnp.float32)

    # ---- CLS extraction ----------------------------------------------------
    x_kwargs = {}
    if num_tiles > 2 and hasattr(pl, "Buffered"):
        # Deeper buffering on the strided CLS row-gather when the grid is long.
        x_kwargs["pipeline_mode"] = pl.Buffered(3)

    if B == B_pad:
        # Tile-aligned batch: the BlockSpec DMA pulls CLS rows straight from
        # the raw (B, S, H) buffer -- zero wrapper-side copies.
        x_in = hidden_states
        x_spec = pl.BlockSpec((TB, None, H), lambda i: (i, 0, 0), **x_kwargs)
    else:
        # Ragged batch: extract / pad only the tiny (B, H) CLS slab, never the
        # full (B, S, H) hidden_states.
        cls = hidden_states[:, 0, :]
        x_in = jnp.pad(cls, ((0, B_pad - B), (0, 0)))
        x_spec = pl.BlockSpec((TB, H), lambda i: (i, 0), **x_kwargs)
    x_bytes = B_pad * H * np.dtype(in_dtype).itemsize

    w_item = np.dtype(compute_dtype).itemsize
    cost = pl.CostEstimate(
        flops=2 * B_pad * H * (H + NL_pad),
        transcendentals=B_pad * H,                              # tanh
        bytes_accessed=(x_bytes
                        + (H * H + H * NL_pad) * w_item        # resident weights
                        + (H + NL_pad) * 4                     # biases (f32)
                        + B_pad * NL_pad * 4                   # logits (f32)
                        + B_pad * H * np.dtype(in_dtype).itemsize),
    )

    logits_pad, pooled_pad = pl.pallas_call(
        _highway_kernel,
        out_shape=(
            jax.ShapeDtypeStruct((B_pad, NL_pad), jnp.float32),  # logits kept in f32
            jax.ShapeDtypeStruct((B_pad, H), in_dtype),
        ),
        grid=(num_tiles,),
        in_specs=[
            x_spec,
            # Weights/biases: constant index_map -> DMA'd once, resident across
            # all batch tiles.
            pl.BlockSpec((H, H), lambda i: (0, 0)),
            pl.BlockSpec((1, H), lambda i: (0, 0)),
            pl.BlockSpec((H, NL_pad), lambda i: (0, 0)),
            pl.BlockSpec((1, NL_pad), lambda i: (0, 0)),
        ],
        out_specs=(
            pl.BlockSpec((TB, NL_pad), lambda i: (i, 0)),
            pl.BlockSpec((TB, H), lambda i: (i, 0)),
        ),
        compiler_params=pltpu.CompilerParams(
            dimension_semantics=("parallel",),
            vmem_limit_bytes=64 * 1024 * 1024,
        ),
        cost_estimate=cost,
    )(x_in, wp_t, bp, wc_t, bc)

    # NOTE: padded batch rows hold tanh(bp) / bias-only logits (bounded, no
    # NaN/Inf).  They are sliced off here -- never consume the padded buffers.
    return logits_pad[:B, :num_labels], pooled_pad[:B, :]


if __name__ == "__main__":
    # Small config consistent with the module: dim=32, num_labels=2, batch=2, seq=8.
    B, S, H, NUM_LABELS = 2, 8, 32, 2

    key = jax.random.PRNGKey(0)
    k_x, k_wp, k_bp, k_wc, k_bc, k_x2 = jax.random.split(key, 6)

    hidden_states = jax.random.normal(k_x, (B, S, H), dtype=jnp.float32)
    pooler_w = jax.random.normal(k_wp, (H, H), dtype=jnp.float32) * 0.02
    pooler_b = jax.random.normal(k_bp, (H,), dtype=jnp.float32) * 0.02
    clf_w = jax.random.normal(k_wc, (NUM_LABELS, H), dtype=jnp.float32) * 0.02
    clf_b = jax.random.normal(k_bc, (NUM_LABELS,), dtype=jnp.float32) * 0.02

    def reference(hs):
        pooled = jnp.tanh(hs[:, 0, :] @ pooler_w.T + pooler_b)
        return pooled @ clf_w.T + clf_b, pooled

    ref_logits, ref_pooled = reference(hidden_states)

    # 1) Exact-math path (f32 MXU compute), ragged batch (B=2) -> wrapper-side
    #    CLS slab extraction.  Tight tolerance.
    logits, pooled = bert_highway_forward(
        hidden_states, pooler_w, pooler_b, clf_w, clf_b, compute_dtype=jnp.float32)
    jax.block_until_ready((logits, pooled))
    assert logits.shape == (B, NUM_LABELS) and pooled.shape == (B, H)
    assert logits.dtype == jnp.float32
    assert jnp.allclose(pooled, ref_pooled, atol=1e-5, rtol=1e-5)
    assert jnp.allclose(logits, ref_logits, atol=1e-5, rtol=1e-5)

    # 2) Default bf16-MXU path (f32 accumulation) -- small, bounded numeric delta.
    logits_bf, pooled_bf = bert_highway_forward(
        hidden_states, pooler_w, pooler_b, clf_w, clf_b)
    jax.block_until_ready((logits_bf, pooled_bf))
    assert jnp.allclose(pooled_bf, ref_pooled, atol=3e-2, rtol=3e-2)
    assert jnp.allclose(logits_bf, ref_logits, atol=3e-2, rtol=3e-2)

    # 3) Tile-aligned batch (B=8): exercises the in-kernel CLS BlockSpec DMA
    #    that reads straight from the (B, S, H) buffer (no wrapper copies).
    hs8 = jax.random.normal(k_x2, (8, S, H), dtype=jnp.float32)
    ref_logits8, ref_pooled8 = reference(hs8)
    logits8, pooled8 = bert_highway_forward(
        hs8, pooler_w, pooler_b, clf_w, clf_b, compute_dtype=jnp.float32)
    jax.block_until_ready((logits8, pooled8))
    assert jnp.allclose(pooled8, ref_pooled8, atol=1e-5, rtol=1e-5)
    assert jnp.allclose(logits8, ref_logits8, atol=1e-5, rtol=1e-5)

    print("KERNEL_OK")
</pallas_src>

<mosaic_0001>
module attributes {stable_mosaic.version = 11 : i64} {
  func.func @_highway_kernel(%arg0: i32, %arg1: memref<8x32xf32, #tpu.memory_space<vmem>>, %arg2: memref<32x32xf32, #tpu.memory_space<vmem>>, %arg3: memref<1x32xf32, #tpu.memory_space<vmem>>, %arg4: memref<32x128xf32, #tpu.memory_space<vmem>>, %arg5: memref<1x128xf32, #tpu.memory_space<vmem>>, %arg6: memref<8x128xf32, #tpu.memory_space<vmem>>, %arg7: memref<8x32xf32, #tpu.memory_space<vmem>>) attributes {dimension_semantics = [#tpu.dimension_semantics<parallel>], iteration_bounds = array<i64: 1>, scalar_prefetch = 0 : i64, scratch_operands = 0 : i64, tpu.core_type = #tpu.core_type<tc>, window_params = [{transform_indices = @transform_0, window_bounds = array<i64: 8, 32>}, {pipeline_mode = #tpu.pipeline_mode<synchronous>, transform_indices = @transform_1, window_bounds = array<i64: 32, 32>}, {pipeline_mode = #tpu.pipeline_mode<synchronous>, transform_indices = @transform_2, window_bounds = array<i64: 1, 32>}, {pipeline_mode = #tpu.pipeline_mode<synchronous>, transform_indices = @transform_3, window_bounds = array<i64: 32, 128>}, {pipeline_mode = #tpu.pipeline_mode<synchronous>, transform_indices = @transform_4, window_bounds = array<i64: 1, 128>}, {transform_indices = @transform_5, window_bounds = array<i64: 8, 128>}, {transform_indices = @transform_6, window_bounds = array<i64: 8, 32>}]} {
    %c0 = arith.constant 0 : index
    %c0_0 = arith.constant 0 : index
    %0 = vector.load %arg1[%c0, %c0_0] : memref<8x32xf32, #tpu.memory_space<vmem>>, vector<8x32xf32>
    %c0_1 = arith.constant 0 : index
    %c0_2 = arith.constant 0 : index
    %1 = vector.load %arg2[%c0_1, %c0_2] : memref<32x32xf32, #tpu.memory_space<vmem>>, vector<32x32xf32>
    %cst = arith.constant dense<0.000000e+00> : vector<8x32xf32>
    %2 = tpu.matmul %0, %1, %cst {dimension_numbers = #tpu.dot_dimension_numbers<[1], [0], [0], [1], [0, 0, 1, 1], [], []>} : vector<8x32xf32>, vector<32x32xf32>, vector<8x32xf32> -> vector<8x32xf32>
    %c0_3 = arith.constant 0 : index
    %c0_4 = arith.constant 0 : index
    %3 = vector.load %arg3[%c0_3, %c0_4] : memref<1x32xf32, #tpu.memory_space<vmem>>, vector<1x32xf32>
    %4 = vector.broadcast %3 : vector<1x32xf32> to vector<8x32xf32>
    %5 = arith.addf %2, %4 : vector<8x32xf32>
    %6 = math.tanh %5 : vector<8x32xf32>
    %c0_5 = arith.constant 0 : index
    %c0_6 = arith.constant 0 : index
    %7 = vector.load %arg7[%c0_5, %c0_6] : memref<8x32xf32, #tpu.memory_space<vmem>>, vector<8x32xf32>
    tpu.vector_store %arg7[%c0_5, %c0_6], %6 {strides = array<i32>} : memref<8x32xf32, #tpu.memory_space<vmem>>, vector<8x32xf32>,
    %c0_7 = arith.constant 0 : index
    %c0_8 = arith.constant 0 : index
    %8 = vector.load %arg4[%c0_7, %c0_8] : memref<32x128xf32, #tpu.memory_space<vmem>>, vector<32x128xf32>
    %cst_9 = arith.constant dense<0.000000e+00> : vector<8x128xf32>
    %9 = tpu.matmul %6, %8, %cst_9 {dimension_numbers = #tpu.dot_dimension_numbers<[1], [0], [0], [1], [0, 0, 1, 1], [], []>} : vector<8x32xf32>, vector<32x128xf32>, vector<8x128xf32> -> vector<8x128xf32>
    %c0_10 = arith.constant 0 : index
    %c0_11 = arith.constant 0 : index
    %10 = vector.load %arg5[%c0_10, %c0_11] : memref<1x128xf32, #tpu.memory_space<vmem>>, vector<1x128xf32>
    %11 = vector.broadcast %10 : vector<1x128xf32> to vector<8x128xf32>
    %12 = arith.addf %9, %11 : vector<8x128xf32>
    %c0_12 = arith.constant 0 : index
    %c0_13 = arith.constant 0 : index
    %13 = vector.load %arg6[%c0_12, %c0_13] : memref<8x128xf32, #tpu.memory_space<vmem>>, vector<8x128xf32>
    tpu.vector_store %arg6[%c0_12, %c0_13], %12 {strides = array<i32>} : memref<8x128xf32, #tpu.memory_space<vmem>>, vector<8x128xf32>,
    return
  }
  func.func @transform_0(%arg0: i32) -> (i32, i32) {
    %c0_i32 = arith.constant 0 : i32
    %c0_i32_0 = arith.constant 0 : i32
    return %arg0, %c0_i32 : i32, i32
  }
  func.func @transform_1(%arg0: i32) -> (i32, i32) {
    %c0_i32 = arith.constant 0 : i32
    %c0_i32_0 = arith.constant 0 : i32
    %c0_i32_1 = arith.constant 0 : i32
    return %c0_i32, %c0_i32_0 : i32, i32
  }
  func.func @transform_2(%arg0: i32) -> (i32, i32) {
    %c0_i32 = arith.constant 0 : i32
    %c0_i32_0 = arith.constant 0 : i32
    %c0_i32_1 = arith.constant 0 : i32
    return %c0_i32, %c0_i32_0 : i32, i32
  }
  func.func @transform_3(%arg0: i32) -> (i32, i32) {
    %c0_i32 = arith.constant 0 : i32
    %c0_i32_0 = arith.constant 0 : i32
    %c0_i32_1 = arith.constant 0 : i32
    return %c0_i32, %c0_i32_0 : i32, i32
  }
  func.func @transform_4(%arg0: i32) -> (i32, i32) {
    %c0_i32 = arith.constant 0 : i32
    %c0_i32_0 = arith.constant 0 : i32
    %c0_i32_1 = arith.constant 0 : i32
    return %c0_i32, %c0_i32_0 : i32, i32
  }
  func.func @transform_5(%arg0: i32) -> (i32, i32) {
    %c0_i32 = arith.constant 0 : i32
    %c0_i32_0 = arith.constant 0 : i32
    return %arg0, %c0_i32 : i32, i32
  }
  func.func @transform_6(%arg0: i32) -> (i32, i32) {
    %c0_i32 = arith.constant 0 : i32
    %c0_i32_0 = arith.constant 0 : i32
    return %arg0, %c0_i32 : i32, i32
  }
}

</mosaic_0001>

<llo_original>
// kernel: tpu_custom_call.1
$region0: #{tpu_custom_call.1}
  #allocation0 [shape = 'u32[]', space=smem, size = 0x4, offset = 0x4, fixed_abs, tag = 'smem constant byte address 0x4 - core index']
  #allocation1 [shape = 'u32[144,128]{1,0:T(1,128)}', space=vmem, size = 0x12000, scoped, tag = 'internal scratch']
  %s0 = inlined_call_operand.hbm [shape: f32[8,32], index: 0, kind: input, shape index: {}]
  %s1 = inlined_call_operand.hbm [shape: f32[32,32], index: 1, kind: input, shape index: {}]
  %s2 = inlined_call_operand.vmem [shape: f32[1,32], index: 2, kind: input, shape index: {}]
  %s3 = inlined_call_operand.hbm [shape: f32[32,128], index: 3, kind: input, shape index: {}]
  %s4 = inlined_call_operand.vmem [shape: f32[1,128], index: 4, kind: input, shape index: {}]
  %s5 = inlined_call_operand.hbm [shape: f32[8,128], index: 5, kind: output, shape index: {0}]
  %s6 = inlined_call_operand.hbm [shape: f32[8,32], index: 6, kind: output, shape index: {1}]
  %7 = xla_tuple %s5, %s6
  %s8 = sld [smem:[#allocation0]]
  $region50: #{tpu_custom_call.1} parent=0
    _
  %s10 = ssub.s32 1, %s8
  %s11 = scalar_select 0, %s10, %s8
  $region1: #{tpu_custom_call.1} parent=0
    #allocation2 [shape = 'u8[4096]{0}', space=vmem, size = 0x1000, scoped, tag = 'input window, operand 0, single buffered']
    #allocation3 [shape = 's32[1]{0}', space=sflag, size = 0x4, scoped, tag = 'scoped memory for tpu_custom_call.1']
    #allocation4 [shape = 's32[1]{0}', space=sflag, size = 0x4, scoped, tag = 'scoped memory for tpu_custom_call.1']
    #allocation5 [shape = 'u8[16384]{0}', space=vmem, size = 0x4000, scoped, tag = 'input window, operand 1, single buffered']
    #allocation6 [shape = 's32[1]{0}', space=sflag, size = 0x4, scoped, tag = 'scoped memory for tpu_custom_call.1']
    #allocation7 [shape = 'u8[16384]{0}', space=vmem, size = 0x4000, scoped, tag = 'input window, operand 3, single buffered']
    #allocation8 [shape = 'u8[4096]{0}', space=vmem, size = 0x1000, scoped, tag = 'output window, operand 0, single buffered']
    #allocation9 [shape = 'u8[4096]{0}', space=vmem, size = 0x1000, scoped, tag = 'output window, operand 1, single buffered']
    #allocation10 [shape = 's32[1]{0}', space=sflag, size = 0x4, scoped, tag = 'scoped memory for tpu_custom_call.1']
    %12 = vsyncpa [#allocation3], 0
    %13 = vsyncpa [#allocation6], 0
    %14 = vsyncpa [#allocation4], 0
    %15 = vsyncpa [#allocation10], 0
    // Predicated region
    $region2: #{tpu_custom_call.1} parent=1 // pred_check
      _
    $region3: #{tpu_custom_call.1} parent=1 // pred_check_branch
      %17 = sbr.rel (0) target = $region5
    $region4: #{tpu_custom_call.1} parent=1 // pred_region
      %s19 = ssub.s32 128, 128
      %20 = vsyncadd [#allocation3], %s19
      %s22 = sshll.u32 [#allocation2], 4
      %s23 = int_to_ptr.vmem [resolvable:$true] %s22
      %25 = dma.hbm_to_vmem [thread:$0]  %s0, 128, %s23, [#allocation3]
    $region5: #{tpu_custom_call.1} parent=1 // pred_fallthru
      _
    // Predicated region
    $region6: #{tpu_custom_call.1} parent=1 // pred_check
      _
    $region7: #{tpu_custom_call.1} parent=1 // pred_check_branch
      %27 = sbr.rel (0) target = $region9
    $region8: #{tpu_custom_call.1} parent=1 // pred_region
      %s29 = ssub.s32 512, 512
      %30 = vsyncadd [#allocation6], %s29
      %s31 = sshll.u32 [#allocation5], 4
      %s32 = int_to_ptr.vmem [resolvable:$true] %s31
      %37 = dma.hbm_to_vmem [thread:$0]  %s1, 512, %s32, [#allocation6], 128, 128, 8
    $region9: #{tpu_custom_call.1} parent=1 // pred_fallthru
      _
    // Predicated region
    $region10: #{tpu_custom_call.1} parent=1 // pred_check
      _
    $region11: #{tpu_custom_call.1} parent=1 // pred_check_branch
      %39 = sbr.rel (0) target = $region13
    $region12: #{tpu_custom_call.1} parent=1 // pred_region
      _
    $region13: #{tpu_custom_call.1} parent=1 // pred_fallthru
      _
    // Predicated region
    $region14: #{tpu_custom_call.1} parent=1 // pred_check
      _
    $region15: #{tpu_custom_call.1} parent=1 // pred_check_branch
      %41 = sbr.rel (0) target = $region17
    $region16: #{tpu_custom_call.1} parent=1 // pred_region
      %s43 = ssub.s32 512, 512
      %44 = vsyncadd [#allocation6], %s43
      %s45 = sshll.u32 [#allocation7], 4
      %s46 = int_to_ptr.vmem [resolvable:$true] %s45
      %51 = dma.hbm_to_vmem [thread:$0]  %s3, 512, %s46, [#allocation6], 128, 128, 8
    $region17: #{tpu_custom_call.1} parent=1 // pred_fallthru
      _
    // Predicated region
    $region18: #{tpu_custom_call.1} parent=1 // pred_check
      _
    $region19: #{tpu_custom_call.1} parent=1 // pred_check_branch
      %53 = sbr.rel (0) target = $region21
    $region20: #{tpu_custom_call.1} parent=1 // pred_region
      _
    $region21: #{tpu_custom_call.1} parent=1 // pred_fallthru
      _
    // Predicated region
    $region22: #{tpu_custom_call.1} parent=1 // pred_check
      _
    $region23: #{tpu_custom_call.1} parent=1 // pred_check_branch
      %55 = sbr.rel (0) target = $region25
    $region24: #{tpu_custom_call.1} parent=1 // pred_region
      %56 = dma.done [#allocation3], 128
    $region25: #{tpu_custom_call.1} parent=1 // pred_fallthru
      _
    // Predicated region
    $region26: #{tpu_custom_call.1} parent=1 // pred_check
      _
    $region27: #{tpu_custom_call.1} parent=1 // pred_check_branch
      %58 = sbr.rel (0) target = $region29
    $region28: #{tpu_custom_call.1} parent=1 // pred_region
      %59 = dma.done [#allocation6], 512
    $region29: #{tpu_custom_call.1} parent=1 // pred_fallthru
      _
    // Predicated region
    $region30: #{tpu_custom_call.1} parent=1 // pred_check
      _
    $region31: #{tpu_custom_call.1} parent=1 // pred_check_branch
      %61 = sbr.rel (0) target = $region33
    $region32: #{tpu_custom_call.1} parent=1 // pred_region
      %62 = dma.done [#allocation6], 512
    $region33: #{tpu_custom_call.1} parent=1 // pred_fallthru
      _
    %v63 = vld [vmem:[#allocation2] sm:$0xff]
    %v64 = vld [vmem:[#allocation5] sm:$0xff]
    %v65 = vld [vmem:[#allocation5 + $0x8] sm:$0xff]
    %v66 = vld [vmem:[#allocation5 + $0x10] sm:$0xff]
    %v67 = vld [vmem:[#allocation5 + $0x18] sm:$0xff]
    %v68 = vld [vmem:[%s2] sm:$0x1]
    %v70 = vlaneseq
    %v71 = vshrl.u32 %v70, 7
    %v72 = vsub.s32 0, %v71
    %v73 = vrot.slane %v68, %v72
    %vm75 = vcmask 261120
    %v77 = vsel %vm75, %v63, 0
    %79 = vmatprep.subr.mxu0 0.0
    %80 = vmatpush1.msra.mxu0 0.0
    %81 = vmatprep.subr.mxu0 0.0
    %82 = vmatpush1.msra.mxu0 0.0
    %83 = vmatprep.subr.mxu0 0.0
    %84 = vmatpush1.msra.mxu0 0.0
    %85 = vmatprep.subr.mxu0 0.0
    %86 = vmatpush1.msra.mxu0 0.0
    %87 = vmatprep.subr.mxu0 0.0
    %88 = vmatpush1.msra.mxu0 0.0
    %89 = vmatprep.subr.mxu0 0.0
    %90 = vmatpush1.msra.mxu0 0.0
    %91 = vmatprep.subr.mxu0 0.0
    %92 = vmatpush1.msra.mxu0 0.0
    %93 = vmatprep.subr.mxu0 0.0
    %94 = vmatpush1.msra.mxu0 0.0
    %95 = vmatprep.subr.mxu0 0.0
    %96 = vmatpush1.msra.mxu0 0.0
    %97 = vmatprep.subr.mxu0 0.0
    %98 = vmatpush1.msra.mxu0 0.0
    %99 = vmatprep.subr.mxu0 0.0
    %100 = vmatpush1.msra.mxu0 0.0
    %101 = vmatprep.subr.mxu0 0.0
    %102 = vmatpush1.msra.mxu0 0.0
    %103 = vmatprep.subr.mxu0 0.0
    %104 = vmatpush1.msra.mxu0 %v67
    %105 = vmatprep.subr.mxu0 0.0
    %106 = vmatpush1.msra.mxu0 %v66
    %107 = vmatprep.subr.mxu0 0.0
    %108 = vmatpush1.msra.mxu0 %v65
    %109 = vmatprep.subr.mxu0 0.0
    %110 = vmatpush1.msra.mxu0 %v64
    %111 = vmatprep.subr.mxu0 0.0
    %112 = vmatpush2.msra.mxu0 0.0
    %113 = vmatprep.subr.mxu0 0.0
    %114 = vmatpush2.msra.mxu0 0.0
    %115 = vmatprep.subr.mxu0 0.0
    %116 = vmatpush2.msra.mxu0 0.0
    %117 = vmatprep.subr.mxu0 0.0
    %118 = vmatpush2.msra.mxu0 0.0
    %119 = vmatprep.subr.mxu0 0.0
    %120 = vmatpush2.msra.mxu0 0.0
    %121 = vmatprep.subr.mxu0 0.0
    %122 = vmatpush2.msra.mxu0 0.0
    %123 = vmatprep.subr.mxu0 0.0
    %124 = vmatpush2.msra.mxu0 0.0
    %125 = vmatprep.subr.mxu0 0.0
    %126 = vmatpush2.msra.mxu0 0.0
    %127 = vmatprep.subr.mxu0 0.0
    %128 = vmatpush2.msra.mxu0 0.0
    %129 = vmatprep.subr.mxu0 0.0
    %130 = vmatpush2.msra.mxu0 0.0
    %131 = vmatprep.subr.mxu0 0.0
    %132 = vmatpush2.msra.mxu0 0.0
    %133 = vmatprep.subr.mxu0 0.0
    %134 = vmatpush2.msra.mxu0 0.0
    %135 = vmatprep.subr.mxu0 0.0
    %136 = vmatpush2.msra.mxu0 0.0
    %137 = vmatprep.subr.mxu0 0.0
    %138 = vmatpush2.msra.mxu0 0.0
    %139 = vmatprep.subr.mxu0 0.0
    %140 = vmatpush2.msra.mxu0 0.0
    %141 = vmatprep.subr.mxu0 0.0
    %142 = vmatpush2.msra.mxu0 0.0
    %143 = vmatprep.mubr.f32.mxu0 0.0
    %144 = vmatmul.mubr.f32.gmra.mxu0 %v77
    %v145 = vpop.f32.mrf.mxu0
    %v146 = vadd.f32 %v73, %v145
    %v147 = vpop.f32.mrf.mxu0
    %148 = vdwg.mxu0
    %v149 = vtanh.pop %v146
    %150 = vst.msk [vmem:[#allocation9] sm:$0xff] %vm75, %v149
    %v151 = vld [vmem:[#allocation7] sm:$0xff]
    %v152 = vld [vmem:[#allocation7 + $0x8] sm:$0xff]
    %v153 = vld [vmem:[#allocation7 + $0x10] sm:$0xff]
    %v154 = vld [vmem:[#allocation7 + $0x18] sm:$0xff]
    %v155 = vld [vmem:[%s4] sm:$0x1]
    %v157 = vlaneseq
    %v158 = vshrl.u32 %v157, 7
    %v159 = vsub.s32 0, %v158
    %v160 = vrot.slane %v155, %v159
    %v163 = vsel %vm75, %v149, 0
    %165 = vmatprep.subr.mxu0 0.0
    %166 = vmatpush1.msra.mxu0 0.0
    %167 = vmatprep.subr.mxu0 0.0
    %168 = vmatpush1.msra.mxu0 0.0
    %169 = vmatprep.subr.mxu0 0.0
    %170 = vmatpush1.msra.mxu0 0.0
    %171 = vmatprep.subr.mxu0 0.0
    %172 = vmatpush1.msra.mxu0 0.0
    %173 = vmatprep.subr.mxu0 0.0
    %174 = vmatpush1.msra.mxu0 0.0
    %175 = vmatprep.subr.mxu0 0.0
    %176 = vmatpush1.msra.mxu0 0.0
    %177 = vmatprep.subr.mxu0 0.0
    %178 = vmatpush1.msra.mxu0 0.0
    %179 = vmatprep.subr.mxu0 0.0
    %180 = vmatpush1.msra.mxu0 0.0
    %181 = vmatprep.subr.mxu0 0.0
    %182 = vmatpush1.msra.mxu0 0.0
    %183 = vmatprep.subr.mxu0 0.0
    %184 = vmatpush1.msra.mxu0 0.0
    %185 = vmatprep.subr.mxu0 0.0
    %186 = vmatpush1.msra.mxu0 0.0
    %187 = vmatprep.subr.mxu0 0.0
    %188 = vmatpush1.msra.mxu0 0.0
    %189 = vmatprep.subr.mxu0 0.0
    %190 = vmatpush1.msra.mxu0 %v154
    %191 = vmatprep.subr.mxu0 0.0
    %192 = vmatpush1.msra.mxu0 %v153
    %193 = vmatprep.subr.mxu0 0.0
    %194 = vmatpush1.msra.mxu0 %v152
    %195 = vmatprep.subr.mxu0 0.0
    %196 = vmatpush1.msra.mxu0 %v151
    %197 = vmatprep.subr.mxu0 0.0
    %198 = vmatpush2.msra.mxu0 0.0
    %199 = vmatprep.subr.mxu0 0.0
    %200 = vmatpush2.msra.mxu0 0.0
    %201 = vmatprep.subr.mxu0 0.0
    %202 = vmatpush2.msra.mxu0 0.0
    %203 = vmatprep.subr.mxu0 0.0
    %204 = vmatpush2.msra.mxu0 0.0
    %205 = vmatprep.subr.mxu0 0.0
    %206 = vmatpush2.msra.mxu0 0.0
    %207 = vmatprep.subr.mxu0 0.0
    %208 = vmatpush2.msra.mxu0 0.0
    %209 = vmatprep.subr.mxu0 0.0
    %210 = vmatpush2.msra.mxu0 0.0
    %211 = vmatprep.subr.mxu0 0.0
    %212 = vmatpush2.msra.mxu0 0.0
    %213 = vmatprep.subr.mxu0 0.0
    %214 = vmatpush2.msra.mxu0 0.0
    %215 = vmatprep.subr.mxu0 0.0
    %216 = vmatpush2.msra.mxu0 0.0
    %217 = vmatprep.subr.mxu0 0.0
    %218 = vmatpush2.msra.mxu0 0.0
    %219 = vmatprep.subr.mxu0 0.0
    %220 = vmatpush2.msra.mxu0 0.0
    %221 = vmatprep.subr.mxu0 0.0
    %222 = vmatpush2.msra.mxu0 0.0
    %223 = vmatprep.subr.mxu0 0.0
    %224 = vmatpush2.msra.mxu0 0.0
    %225 = vmatprep.subr.mxu0 0.0
    %226 = vmatpush2.msra.mxu0 0.0
    %227 = vmatprep.subr.mxu0 0.0
    %228 = vmatpush2.msra.mxu0 0.0
    %229 = vmatprep.mubr.f32.mxu0 0.0
    %230 = vmatmul.mubr.f32.gmra.mxu0 %v163
    %v231 = vpop.f32.mrf.mxu0
    %v232 = vadd.f32 %v160, %v231
    %v233 = vpop.f32.mrf.mxu0
    %234 = vdwg.mxu0
    %235 = vst [vmem:[#allocation8] sm:$0xff] %v232
    // Predicated region
    $region34: #{tpu_custom_call.1} parent=1 // pred_check
      _
    $region35: #{tpu_custom_call.1} parent=1 // pred_check_branch
      %237 = sbr.rel (0) target = $region37
    $region36: #{tpu_custom_call.1} parent=1 // pred_region
      %s239 = ssub.s32 128, 128
      %240 = vsyncadd [#allocation4], %s239
      %s242 = sshll.u32 [#allocation8], 4
      %s243 = int_to_ptr.vmem [resolvable:$true] %s242
      %245 = dma.vmem_to_hbm [thread:$0]  %s243, 128, %s5, [#allocation4]
    $region37: #{tpu_custom_call.1} parent=1 // pred_fallthru
      _
    // Predicated region
    $region38: #{tpu_custom_call.1} parent=1 // pred_check
      _
    $region39: #{tpu_custom_call.1} parent=1 // pred_check_branch
      %247 = sbr.rel (0) target = $region41
    $region40: #{tpu_custom_call.1} parent=1 // pred_region
      %s249 = ssub.s32 128, 128
      %250 = vsyncadd [#allocation10], %s249
      %s252 = sshll.u32 [#allocation9], 4
      %s253 = int_to_ptr.vmem [resolvable:$true] %s252
      %255 = dma.vmem_to_hbm [thread:$0]  %s253, 128, %s6, [#allocation10]
    $region41: #{tpu_custom_call.1} parent=1 // pred_fallthru
      _
    // Predicated region
    $region42: #{tpu_custom_call.1} parent=1 // pred_check
      _
    $region43: #{tpu_custom_call.1} parent=1 // pred_check_branch
      %257 = sbr.rel (0) target = $region45
    $region44: #{tpu_custom_call.1} parent=1 // pred_region
      %258 = dma.done [#allocation4], 128
    $region45: #{tpu_custom_call.1} parent=1 // pred_fallthru
      _
    // Predicated region
    $region46: #{tpu_custom_call.1} parent=1 // pred_check
      _
    $region47: #{tpu_custom_call.1} parent=1 // pred_check_branch
      %260 = sbr.rel (0) target = $region49
    $region48: #{tpu_custom_call.1} parent=1 // pred_region
      %261 = dma.done [#allocation10], 128
    $region49: #{tpu_custom_call.1} parent=1 // pred_fallthru
      _
    %262 = vsyncpa [#allocation3], 1
    %263 = vsyncpa [#allocation6], 1
    %264 = vsyncpa [#allocation4], 1
    %265 = vsyncpa [#allocation10], 1

</llo_original>
